<compile_context>
chip_gen: v7x
topology: tpu7x:2x2x1
jax: 0.10.0
libtpu: 0.0.40
codegen_flags: <defaults>
</compile_context>

<pallas_src>
import functools

import jax
import jax.numpy as jnp
from jax.experimental import pallas as pl
from jax.experimental.pallas import tpu as pltpu

LANES = 128                       # lane width; fused feature dims live inside 128 lanes
W_ROWS = LANES                    # each fused weight block is [128, 128]
N_LAYERS = 4
SLAB_ROWS = N_LAYERS * W_ROWS     # 512
BIAS_ROW = LANES - 1              # row 127 of each weight block holds that layer's bias


def _round_up(n, m):
    return ((n + m - 1) // m) * m


def _actor_critic_kernel(x_ref, slab_ref, out_ref, *, state_size, action_size, out_lanes):
    """x_ref: [TB, S] f32; slab_ref: [512, 128] compute dtype; out_ref: [TB, out_lanes] f32."""
    cdt = slab_ref.dtype
    x = x_ref[...].astype(cdt)                                    # cast in-kernel (no padded HBM copy)

    # Layer 1: x[TB,S] @ W1[S,128] + explicit bias (row 127 of the layer-1 block).
    # The bias row carries a 1.0 in lane 127, which feeds the MXU-folded biases below.
    w1 = slab_ref[0:state_size, :]                                # static slice -> [S, 128]
    b1 = slab_ref[BIAS_ROW:BIAS_ROW + 1, :].astype(jnp.float32)   # [1, 128]
    y = jnp.dot(x, w1, preferred_element_type=jnp.float32) + b1
    h = jnp.maximum(y, 0.0).astype(cdt)

    # Layers 2..4: bias rides the MXU via weight row 127 (lane 127 of h is 1.0;
    # W[127,127]=1 in layers 2/3 keeps it alive through the ReLUs).
    for l in range(1, N_LAYERS):
        w = slab_ref[l * W_ROWS:(l + 1) * W_ROWS, :]              # static slice, [128, 128]
        y = jnp.dot(h, w, preferred_element_type=jnp.float32)
        if l < N_LAYERS - 1:
            h = jnp.maximum(y, 0.0).astype(cdt)

    # mu in lanes [0, A) -> tanh; critic value in lane A -> identity.
    y_out = y[:, :out_lanes]
    lane = jax.lax.broadcasted_iota(jnp.int32, y_out.shape, 1)
    out_ref[...] = jnp.where(lane < action_size, jnp.tanh(y_out), y_out).astype(out_ref.dtype)


def _pack_params(actor_params, critic_params):
    """Pack all 16 actor/critic tensors into one (512, 128) float32 slab.

    Layout per 128x128 block l (rows l*128 .. l*128+127):
      rows [0,S) / block-diagonal [0,2H): fused actor|critic weights
      row 127: fused bias; lane 127 set to 1.0 for layers 1..3 (constant carrier)
    """
    aw1, ab1, aw2, ab2, aw3, ab3, aw4, ab4 = actor_params
    cw1, cb1, cw2, cb2, cw3, cb3, cw4, cb4 = critic_params
    S, H = aw1.shape
    A = aw4.shape[1]
    assert S <= LANES - 1, "state_size must leave row 127 free for the bias"
    assert 2 * H <= LANES - 1, "2*hidden_size must leave lane 127 free for the constant"
    assert A + 1 <= LANES - 1

    slab = jnp.zeros((SLAB_ROWS, LANES), jnp.float32)

    # layer 1: shared input; actor -> lanes [0,H), critic -> lanes [H,2H)
    slab = slab.at[0:S, 0:H].set(aw1)
    slab = slab.at[0:S, H:2 * H].set(cw1)
    slab = slab.at[BIAS_ROW, 0:H].set(ab1.reshape(-1))
    slab = slab.at[BIAS_ROW, H:2 * H].set(cb1.reshape(-1))
    slab = slab.at[BIAS_ROW, LANES - 1].set(1.0)          # constant lane fed to layer 2

    # layers 2, 3: block-diagonal weights; bias in row 127; W[127,127]=1 carries the 1.0
    for l, (aw, cw, ab, cb) in ((1, (aw2, cw2, ab2, cb2)), (2, (aw3, cw3, ab3, cb3))):
        r = l * W_ROWS
        slab = slab.at[r:r + H, 0:H].set(aw)
        slab = slab.at[r + H:r + 2 * H, H:2 * H].set(cw)
        slab = slab.at[r + BIAS_ROW, 0:H].set(ab.reshape(-1))
        slab = slab.at[r + BIAS_ROW, H:2 * H].set(cb.reshape(-1))
        slab = slab.at[r + BIAS_ROW, LANES - 1].set(1.0)

    # layer 4: actor -> lanes [0,A), critic -> lane A; bias in row 127
    r = 3 * W_ROWS
    slab = slab.at[r:r + H, 0:A].set(aw4)
    slab = slab.at[r + H:r + 2 * H, A:A + 1].set(cw4)
    slab = slab.at[r + BIAS_ROW, 0:A].set(ab4.reshape(-1))
    slab = slab.at[r + BIAS_ROW, A].set(cb4.reshape(-1)[0])
    return slab


def actor_critic_forward(x, actor_params, critic_params, std,
                         *, block_b=1024, compute_dtype=jnp.bfloat16):
    """Returns (mu, std, values) with mu:[B,A] f32, values:[B] f32."""
    B, S = x.shape
    A = actor_params[6].shape[1]                 # aw4: [H, A]
    out_lanes = min(LANES, _round_up(A + 1, 8))  # narrow lane-dense output: [mu | value | pad]

    slab = _pack_params(actor_params, critic_params).astype(compute_dtype)

    # Batch tiling: at most block_b rows per tile, but aim for >= 2 grid steps when B
    # is large enough so v7x can shard the "parallel" batch axis across both TCs.
    row_mult = 8                                 # x / out are f32 on the HBM side
    tb_cap = _round_up(block_b, row_mult)
    tb_half = _round_up(max(1, -(-B // 2)), row_mult)
    TB = max(row_mult, min(tb_cap, tb_half))
    B_pad = _round_up(B, TB)
    n_blocks = B_pad // TB

    x_in = x if B_pad == B else jnp.zeros((B_pad, S), x.dtype).at[:B].set(x)

    out = pl.pallas_call(
        functools.partial(_actor_critic_kernel,
                          state_size=S, action_size=A, out_lanes=out_lanes),
        out_shape=jax.ShapeDtypeStruct((B_pad, out_lanes), jnp.float32),
        grid=(n_blocks,),
        in_specs=[
            pl.BlockSpec((TB, S), lambda i: (i, 0)),               # activations: tiled on batch
            pl.BlockSpec((SLAB_ROWS, LANES), lambda i: (0, 0)),    # weights: constant index ->
                                                                   # fetched once, VMEM-resident
        ],
        out_specs=pl.BlockSpec((TB, out_lanes), lambda i: (i, 0)),
        compiler_params=pltpu.CompilerParams(
            dimension_semantics=("parallel",),                     # v7x: shard batch over 2 TCs
        ),
    )(x_in, slab)

    packed = out[:B, :A + 1]      # single merged slice of the narrow output
    mu = packed[:, :A]
    values = packed[:, A]
    return mu, std, values


# ----------------------------- parameter init -----------------------------

def _init_linear(key, in_f, out_f, scale=0.1):
    kw, kb = jax.random.split(key)
    w = scale * jax.random.normal(kw, (in_f, out_f), dtype=jnp.float32)
    b = scale * jax.random.normal(kb, (1, out_f), dtype=jnp.float32)
    return w, b


def _init_mlp(key, in_f, hidden, out_f):
    k1, k2, k3, k4 = jax.random.split(key, 4)
    w1, b1 = _init_linear(k1, in_f, hidden)
    w2, b2 = _init_linear(k2, hidden, hidden)
    w3, b3 = _init_linear(k3, hidden, hidden)
    w4, b4 = _init_linear(k4, hidden, out_f)
    return (w1, b1, w2, b2, w3, b3, w4, b4)


def _ref_forward(x, actor_params, critic_params, compute_dtype):
    """Pure-JAX reference mirroring the kernel's dtype policy (bf16 matmul, f32 accumulate)."""
    def mlp(inp, params):
        h = inp.astype(compute_dtype)
        y = None
        for i in range(4):
            w = params[2 * i].astype(compute_dtype)
            b = params[2 * i + 1].astype(compute_dtype).astype(jnp.float32)
            y = jnp.dot(h, w, preferred_element_type=jnp.float32) + b
            if i < 3:
                h = jnp.maximum(y, 0.0).astype(compute_dtype)
        return y
    mu = jnp.tanh(mlp(x, actor_params))
    values = jnp.squeeze(mlp(x, critic_params), axis=-1)
    return mu, values


if __name__ == "__main__":
    batch = 8
    state_size = 16
    action_size = 4
    hidden_size = 32

    key = jax.random.PRNGKey(0)
    kx, ka, kc = jax.random.split(key, 3)

    x = jax.random.normal(kx, (batch, state_size), dtype=jnp.float32)
    actor_params = _init_mlp(ka, state_size, hidden_size, action_size)
    critic_params = _init_mlp(kc, state_size, hidden_size, 1)
    std = jnp.ones((1, action_size), dtype=jnp.float32)   # nn.Parameter(torch.ones(1, A))

    mu, std_out, values = actor_critic_forward(x, actor_params, critic_params, std)
    jax.block_until_ready((mu, std_out, values))

    # sanity check against a pure-JAX reference using the same dtype policy
    mu_ref, val_ref = _ref_forward(x, actor_params, critic_params, jnp.bfloat16)
    assert mu.shape == (batch, action_size)
    assert values.shape == (batch,)
    assert std_out.shape == (1, action_size)
    assert jnp.allclose(mu, mu_ref, atol=5e-3, rtol=5e-3)
    assert jnp.allclose(values, val_ref, atol=5e-3, rtol=5e-3)

    print("KERNEL_OK")
</pallas_src>

<mosaic_0001>
module attributes {stable_mosaic.version = 11 : i64} {
  func.func @_actor_critic_kernel(%arg0: i32, %arg1: memref<8x16xf32, #tpu.memory_space<vmem>>, %arg2: memref<512x128xbf16, #tpu.memory_space<vmem>>, %arg3: memref<8x8xf32, #tpu.memory_space<vmem>>) attributes {dimension_semantics = [#tpu.dimension_semantics<parallel>], iteration_bounds = array<i64: 1>, scalar_prefetch = 0 : i64, scratch_operands = 0 : i64, tpu.core_type = #tpu.core_type<tc>, window_params = [{transform_indices = @transform_0, window_bounds = array<i64: 8, 16>}, {pipeline_mode = #tpu.pipeline_mode<synchronous>, transform_indices = @transform_1, window_bounds = array<i64: 512, 128>}, {transform_indices = @transform_2, window_bounds = array<i64: 8, 8>}]} {
    %c0 = arith.constant 0 : index
    %c0_0 = arith.constant 0 : index
    %0 = vector.load %arg1[%c0, %c0_0] : memref<8x16xf32, #tpu.memory_space<vmem>>, vector<8x16xf32>
    %1 = arith.truncf %0 : vector<8x16xf32> to vector<8x16xbf16>
    %c0_1 = arith.constant 0 : index
    %c0_2 = arith.constant 0 : index
    %2 = vector.load %arg2[%c0_1, %c0_2] : memref<512x128xbf16, #tpu.memory_space<vmem>>, vector<16x128xbf16>
    %c127 = arith.constant 127 : index
    %c0_3 = arith.constant 0 : index
    %3 = vector.load %arg2[%c127, %c0_3] : memref<512x128xbf16, #tpu.memory_space<vmem>>, vector<1x128xbf16>
    %4 = arith.extf %3 : vector<1x128xbf16> to vector<1x128xf32>
    %cst = arith.constant dense<0.000000e+00> : vector<8x128xf32>
    %5 = tpu.matmul %1, %2, %cst {dimension_numbers = #tpu.dot_dimension_numbers<[1], [0], [0], [1], [0, 0, 1, 1], [], []>} : vector<8x16xbf16>, vector<16x128xbf16>, vector<8x128xf32> -> vector<8x128xf32>
    %6 = vector.broadcast %4 : vector<1x128xf32> to vector<8x128xf32>
    %7 = arith.addf %5, %6 : vector<8x128xf32>
    %cst_4 = arith.constant 0.000000e+00 : f32
    %8 = vector.broadcast %cst_4 : f32 to vector<8x128xf32>
    %9 = arith.maximumf %7, %8 : vector<8x128xf32>
    %10 = arith.truncf %9 : vector<8x128xf32> to vector<8x128xbf16>
    %c128 = arith.constant 128 : index
    %c0_5 = arith.constant 0 : index
    %11 = vector.load %arg2[%c128, %c0_5] : memref<512x128xbf16, #tpu.memory_space<vmem>>, vector<128x128xbf16>
    %cst_6 = arith.constant dense<0.000000e+00> : vector<8x128xf32>
    %12 = tpu.matmul %10, %11, %cst_6 {dimension_numbers = #tpu.dot_dimension_numbers<[1], [0], [0], [1], [0, 0, 1, 1], [], []>} : vector<8x128xbf16>, vector<128x128xbf16>, vector<8x128xf32> -> vector<8x128xf32>
    %cst_7 = arith.constant 0.000000e+00 : f32
    %13 = vector.broadcast %cst_7 : f32 to vector<8x128xf32>
    %14 = arith.maximumf %12, %13 : vector<8x128xf32>
    %15 = arith.truncf %14 : vector<8x128xf32> to vector<8x128xbf16>
    %c256 = arith.constant 256 : index
    %c0_8 = arith.constant 0 : index
    %16 = vector.load %arg2[%c256, %c0_8] : memref<512x128xbf16, #tpu.memory_space<vmem>>, vector<128x128xbf16>
    %cst_9 = arith.constant dense<0.000000e+00> : vector<8x128xf32>
    %17 = tpu.matmul %15, %16, %cst_9 {dimension_numbers = #tpu.dot_dimension_numbers<[1], [0], [0], [1], [0, 0, 1, 1], [], []>} : vector<8x128xbf16>, vector<128x128xbf16>, vector<8x128xf32> -> vector<8x128xf32>
    %cst_10 = arith.constant 0.000000e+00 : f32
    %18 = vector.broadcast %cst_10 : f32 to vector<8x128xf32>
    %19 = arith.maximumf %17, %18 : vector<8x128xf32>
    %20 = arith.truncf %19 : vector<8x128xf32> to vector<8x128xbf16>
    %c384 = arith.constant 384 : index
    %c0_11 = arith.constant 0 : index
    %21 = vector.load %arg2[%c384, %c0_11] : memref<512x128xbf16, #tpu.memory_space<vmem>>, vector<128x128xbf16>
    %cst_12 = arith.constant dense<0.000000e+00> : vector<8x128xf32>
    %22 = tpu.matmul %20, %21, %cst_12 {dimension_numbers = #tpu.dot_dimension_numbers<[1], [0], [0], [1], [0, 0, 1, 1], [], []>} : vector<8x128xbf16>, vector<128x128xbf16>, vector<8x128xf32> -> vector<8x128xf32>
    %23 = vector.extract_strided_slice %22 {offsets = [0, 0], sizes = [8, 8], strides = [1, 1]} : vector<8x128xf32> to vector<8x8xf32>
    %24 = tpu.iota {dimensions = array<i32: 1>} : vector<8x8xi32>
    %c4_i32 = arith.constant 4 : i32
    %25 = vector.broadcast %c4_i32 : i32 to vector<8x8xi32>
    %26 = arith.cmpi slt, %24, %25 : vector<8x8xi32>
    %27 = math.tanh %23 : vector<8x8xf32>
    %28 = arith.select %26, %27, %23 : vector<8x8xi1>, vector<8x8xf32>
    %c0_13 = arith.constant 0 : index
    %c0_14 = arith.constant 0 : index
    %29 = vector.load %arg3[%c0_13, %c0_14] : memref<8x8xf32, #tpu.memory_space<vmem>>, vector<8x8xf32>
    tpu.vector_store %arg3[%c0_13, %c0_14], %28 {strides = array<i32>} : memref<8x8xf32, #tpu.memory_space<vmem>>, vector<8x8xf32>,
    return
  }
  func.func @transform_0(%arg0: i32) -> (i32, i32) {
    %c0_i32 = arith.constant 0 : i32
    %c0_i32_0 = arith.constant 0 : i32
    return %arg0, %c0_i32 : i32, i32
  }
  func.func @transform_1(%arg0: i32) -> (i32, i32) {
    %c0_i32 = arith.constant 0 : i32
    %c0_i32_0 = arith.constant 0 : i32
    %c0_i32_1 = arith.constant 0 : i32
    return %c0_i32, %c0_i32_0 : i32, i32
  }
  func.func @transform_2(%arg0: i32) -> (i32, i32) {
    %c0_i32 = arith.constant 0 : i32
    %c0_i32_0 = arith.constant 0 : i32
    return %arg0, %c0_i32 : i32, i32
  }
}

</mosaic_0001>

<llo_original>
// kernel: tpu_custom_call.1
$region0: #{tpu_custom_call.1}
  #allocation0 [shape = 'u32[]', space=smem, size = 0x4, offset = 0x4, fixed_abs, tag = 'smem constant byte address 0x4 - core index']
  #allocation1 [shape = 'u32[144,128]{1,0:T(1,128)}', space=vmem, size = 0x12000, scoped, tag = 'internal scratch']
  %s0 = inlined_call_operand.hbm [shape: f32[8,16], index: 0, kind: input, shape index: {}]
  %s1 = inlined_call_operand.hbm [shape: bf16[512,128], index: 1, kind: input, shape index: {}]
  %s2 = inlined_call_operand.hbm [shape: f32[8,8], index: 2, kind: output, shape index: {}]
  %s3 = sld [smem:[#allocation0]]
  $region26: #{tpu_custom_call.1} parent=0
    _
  %s5 = ssub.s32 1, %s3
  %s6 = scalar_select 0, %s5, %s3
  $region1: #{tpu_custom_call.1} parent=0
    #allocation2 [shape = 'u8[4096]{0}', space=vmem, size = 0x1000, scoped, tag = 'input window, operand 0, single buffered']
    #allocation3 [shape = 's32[1]{0}', space=sflag, size = 0x4, scoped, tag = 'scoped memory for tpu_custom_call.1']
    #allocation4 [shape = 's32[1]{0}', space=sflag, size = 0x4, scoped, tag = 'scoped memory for tpu_custom_call.1']
    #allocation5 [shape = 'u8[131072]{0}', space=vmem, size = 0x20000, scoped, tag = 'input window, operand 1, single buffered']
    #allocation6 [shape = 's32[1]{0}', space=sflag, size = 0x4, scoped, tag = 'scoped memory for tpu_custom_call.1']
    #allocation7 [shape = 'u8[4096]{0}', space=vmem, size = 0x1000, scoped, tag = 'output window, operand 0, single buffered']
    %7 = vsyncpa [#allocation3], 0
    %8 = vsyncpa [#allocation6], 0
    %9 = vsyncpa [#allocation4], 0
    // Predicated region
    $region2: #{tpu_custom_call.1} parent=1 // pred_check
      _
    $region3: #{tpu_custom_call.1} parent=1 // pred_check_branch
      %11 = sbr.rel (0) target = $region5
    $region4: #{tpu_custom_call.1} parent=1 // pred_region
      %s13 = ssub.s32 128, 128
      %14 = vsyncadd [#allocation3], %s13
      %s16 = sshll.u32 [#allocation2], 4
      %s17 = int_to_ptr.vmem [resolvable:$true] %s16
      %19 = dma.hbm_to_vmem [thread:$0]  %s0, 128, %s17, [#allocation3]
    $region5: #{tpu_custom_call.1} parent=1 // pred_fallthru
      _
    // Predicated region
    $region6: #{tpu_custom_call.1} parent=1 // pred_check
      _
    $region7: #{tpu_custom_call.1} parent=1 // pred_check_branch
      %21 = sbr.rel (0) target = $region9
    $region8: #{tpu_custom_call.1} parent=1 // pred_region
      %s23 = ssub.s32 4096, 4096
      %24 = vsyncadd [#allocation6], %s23
      %s25 = sshll.u32 [#allocation5], 4
      %s26 = int_to_ptr.vmem [resolvable:$true] %s25
      %31 = dma.hbm_to_vmem [thread:$0]  %s1, 4096, %s26, [#allocation6], 64, 64, 4
    $region9: #{tpu_custom_call.1} parent=1 // pred_fallthru
      _
    // Predicated region
    $region10: #{tpu_custom_call.1} parent=1 // pred_check
      _
    $region11: #{tpu_custom_call.1} parent=1 // pred_check_branch
      %33 = sbr.rel (0) target = $region13
    $region12: #{tpu_custom_call.1} parent=1 // pred_region
      %34 = dma.done [#allocation3], 128
    $region13: #{tpu_custom_call.1} parent=1 // pred_fallthru
      _
    // Predicated region
    $region14: #{tpu_custom_call.1} parent=1 // pred_check
      _
    $region15: #{tpu_custom_call.1} parent=1 // pred_check_branch
      %36 = sbr.rel (0) target = $region17
    $region16: #{tpu_custom_call.1} parent=1 // pred_region
      %37 = dma.done [#allocation6], 4096
    $region17: #{tpu_custom_call.1} parent=1 // pred_fallthru
      _
    %v39 = vld [vmem:[#allocation2] sm:$0xff]
    %v40 = vpack.c.bf16 %v39, %v39
    %v41 = vld [vmem:[#allocation5] sm:$0xf]
    %v42 = vld [vmem:[#allocation5 + $0x4] sm:$0xf]
    %v43 = vld [vmem:[#allocation5 + $0x3c] sm:$0x8]
    %v44 = vunpack.c.l.bf16 %v43
    %v45 = vlaneseq
    %v46 = vshrl.u32 %v45, 7
    %v47 = vsub.s32 7, %v46
    %v48 = vrot.slane %v44, %v47
    %v51 = vunpack.c.l.b16 %v41
    %v52 = vunpack.c.l.b16 %v42
    %v53 = vpack.c.b16 %v52, %v51
    %vm55 = vcmask 130048
    %v57 = vsel %vm55, %v40, 0
    %59 = vmatprep.subr.bf16.mxu0 0
    %60 = vmatpush1.bf16.msra.mxu0 %v53
    %61 = vmatprep.subr.bf16.mxu0 0
    %62 = vmatpush1.bf16.msra.mxu0 0
    %63 = vmatprep.subr.bf16.mxu0 0
    %64 = vmatpush1.bf16.msra.mxu0 0
    %65 = vmatprep.subr.bf16.mxu0 0
    %66 = vmatpush1.bf16.msra.mxu0 0
    %67 = vmatprep.subr.bf16.mxu0 0
    %68 = vmatpush1.bf16.msra.mxu0 0
    %69 = vmatprep.subr.bf16.mxu0 0
    %70 = vmatpush1.bf16.msra.mxu0 0
    %71 = vmatprep.subr.bf16.mxu0 0
    %72 = vmatpush1.bf16.msra.mxu0 0
    %73 = vmatprep.subr.bf16.mxu0 0
    %74 = vmatpush1.bf16.msra.mxu0 0
    %75 = vmatprep.subr.bf16.mxu0 0
    %76 = vmatpush1.bf16.msra.mxu0 0
    %77 = vmatprep.subr.bf16.mxu0 0
    %78 = vmatpush1.bf16.msra.mxu0 0
    %79 = vmatprep.subr.bf16.mxu0 0
    %80 = vmatpush1.bf16.msra.mxu0 0
    %81 = vmatprep.subr.bf16.mxu0 0
    %82 = vmatpush1.bf16.msra.mxu0 0
    %83 = vmatprep.subr.bf16.mxu0 0
    %84 = vmatpush1.bf16.msra.mxu0 0
    %85 = vmatprep.subr.bf16.mxu0 0
    %86 = vmatpush1.bf16.msra.mxu0 0
    %87 = vmatprep.subr.bf16.mxu0 0
    %88 = vmatpush1.bf16.msra.mxu0 0
    %89 = vmatprep.subr.bf16.mxu0 0
    %90 = vmatpush1.bf16.msra.mxu0 0
    %91 = vmatprep.mubr.bf16.mxu0 0
    %92 = vmatmul.mubr.bf16.gmra.mrb[0].mxu0 %v57
    %v93 = vpop.f32.mrb[0].mxu0
    %v94 = vadd.f32 %v48, %v93
    %v95 = vpop.f32.mrb[0].mxu0
    %v96 = vpop.f32.mrb[0].mxu0
    %v97 = vpop.f32.mrb[0].mxu0
    %98 = vdwg.mxu0
    %v99 = vmax.f32 %v94, 0.0
    %v100 = vpack.c.bf16 %v99, %v99
    %v101 = vld [vmem:[#allocation5 + $0x40] sm:$0xf]
    %v102 = vld [vmem:[#allocation5 + $0x44] sm:$0xf]
    %v103 = vld [vmem:[#allocation5 + $0x48] sm:$0xf]
    %v104 = vld [vmem:[#allocation5 + $0x4c] sm:$0xf]
    %v105 = vld [vmem:[#allocation5 + $0x50] sm:$0xf]
    %v106 = vld [vmem:[#allocation5 + $0x54] sm:$0xf]
    %v107 = vld [vmem:[#allocation5 + $0x58] sm:$0xf]
    %v108 = vld [vmem:[#allocation5 + $0x5c] sm:$0xf]
    %v109 = vld [vmem:[#allocation5 + $0x60] sm:$0xf]
    %v110 = vld [vmem:[#allocation5 + $0x64] sm:$0xf]
    %v111 = vld [vmem:[#allocation5 + $0x68] sm:$0xf]
    %v112 = vld [vmem:[#allocation5 + $0x6c] sm:$0xf]
    %v113 = vld [vmem:[#allocation5 + $0x70] sm:$0xf]
    %v114 = vld [vmem:[#allocation5 + $0x74] sm:$0xf]
    %v115 = vld [vmem:[#allocation5 + $0x78] sm:$0xf]
    %v116 = vld [vmem:[#allocation5 + $0x7c] sm:$0xf]
    %v133 = vunpack.c.l.b16 %v101
    %v134 = vunpack.c.l.b16 %v102
    %v135 = vunpack.c.l.b16 %v103
    %v136 = vunpack.c.l.b16 %v104
    %v137 = vunpack.c.l.b16 %v105
    %v138 = vunpack.c.l.b16 %v106
    %v139 = vunpack.c.l.b16 %v107
    %v140 = vunpack.c.l.b16 %v108
    %v141 = vunpack.c.l.b16 %v109
    %v142 = vunpack.c.l.b16 %v110
    %v143 = vunpack.c.l.b16 %v111
    %v144 = vunpack.c.l.b16 %v112
    %v145 = vunpack.c.l.b16 %v113
    %v146 = vunpack.c.l.b16 %v114
    %v147 = vunpack.c.l.b16 %v115
    %v148 = vunpack.c.l.b16 %v116
    %v149 = vpack.c.b16 %v134, %v133
    %v150 = vpack.c.b16 %v136, %v135
    %v151 = vpack.c.b16 %v138, %v137
    %v152 = vpack.c.b16 %v140, %v139
    %v153 = vpack.c.b16 %v142, %v141
    %v154 = vpack.c.b16 %v144, %v143
    %v155 = vpack.c.b16 %v146, %v145
    %v156 = vpack.c.b16 %v148, %v147
    %165 = vmatprep.subr.bf16.mxu0 0
    %166 = vmatpush1.bf16.msra.mxu0 %v149
    %167 = vmatprep.subr.bf16.mxu0 0
    %168 = vmatpush1.bf16.msra.mxu0 %v150
    %169 = vmatprep.subr.bf16.mxu0 0
    %170 = vmatpush1.bf16.msra.mxu0 %v151
    %171 = vmatprep.subr.bf16.mxu0 0
    %172 = vmatpush1.bf16.msra.mxu0 %v152
    %173 = vmatprep.subr.bf16.mxu0 0
    %174 = vmatpush1.bf16.msra.mxu0 %v153
    %175 = vmatprep.subr.bf16.mxu0 0
    %176 = vmatpush1.bf16.msra.mxu0 %v154
    %177 = vmatprep.subr.bf16.mxu0 0
    %178 = vmatpush1.bf16.msra.mxu0 %v155
    %179 = vmatprep.subr.bf16.mxu0 0
    %180 = vmatpush1.bf16.msra.mxu0 %v156
    %181 = vmatprep.subr.bf16.mxu0 0
    %182 = vmatpush1.bf16.msra.mxu0 0
    %183 = vmatprep.subr.bf16.mxu0 0
    %184 = vmatpush1.bf16.msra.mxu0 0
    %185 = vmatprep.subr.bf16.mxu0 0
    %186 = vmatpush1.bf16.msra.mxu0 0
    %187 = vmatprep.subr.bf16.mxu0 0
    %188 = vmatpush1.bf16.msra.mxu0 0
    %189 = vmatprep.subr.bf16.mxu0 0
    %190 = vmatpush1.bf16.msra.mxu0 0
    %191 = vmatprep.subr.bf16.mxu0 0
    %192 = vmatpush1.bf16.msra.mxu0 0
    %193 = vmatprep.subr.bf16.mxu0 0
    %194 = vmatpush1.bf16.msra.mxu0 0
    %195 = vmatprep.subr.bf16.mxu0 0
    %196 = vmatpush1.bf16.msra.mxu0 0
    %197 = vmatprep.mubr.bf16.mxu0 0
    %198 = vmatmul.mubr.bf16.gmra.mrb[0].mxu0 %v100
    %v199 = vpop.f32.mrb[0].mxu0
    %v200 = vadd.f32 0.0, %v199
    %v201 = vpop.f32.mrb[0].mxu0
    %v202 = vpop.f32.mrb[0].mxu0
    %v203 = vpop.f32.mrb[0].mxu0
    %204 = vdwg.mxu0
    %v205 = vmax.f32 %v200, 0.0
    %v206 = vpack.c.bf16 %v205, %v205
    %v207 = vld [vmem:[#allocation5 + $0x80] sm:$0xf]
    %v208 = vld [vmem:[#allocation5 + $0x84] sm:$0xf]
    %v209 = vld [vmem:[#allocation5 + $0x88] sm:$0xf]
    %v210 = vld [vmem:[#allocation5 + $0x8c] sm:$0xf]
    %v211 = vld [vmem:[#allocation5 + $0x90] sm:$0xf]
    %v212 = vld [vmem:[#allocation5 + $0x94] sm:$0xf]
    %v213 = vld [vmem:[#allocation5 + $0x98] sm:$0xf]
    %v214 = vld [vmem:[#allocation5 + $0x9c] sm:$0xf]
    %v215 = vld [vmem:[#allocation5 + $0xa0] sm:$0xf]
    %v216 = vld [vmem:[#allocation5 + $0xa4] sm:$0xf]
    %v217 = vld [vmem:[#allocation5 + $0xa8] sm:$0xf]
    %v218 = vld [vmem:[#allocation5 + $0xac] sm:$0xf]
    %v219 = vld [vmem:[#allocation5 + $0xb0] sm:$0xf]
    %v220 = vld [vmem:[#allocation5 + $0xb4] sm:$0xf]
    %v221 = vld [vmem:[#allocation5 + $0xb8] sm:$0xf]
    %v222 = vld [vmem:[#allocation5 + $0xbc] sm:$0xf]
    %v239 = vunpack.c.l.b16 %v207
    %v240 = vunpack.c.l.b16 %v208
    %v241 = vunpack.c.l.b16 %v209
    %v242 = vunpack.c.l.b16 %v210
    %v243 = vunpack.c.l.b16 %v211
    %v244 = vunpack.c.l.b16 %v212
    %v245 = vunpack.c.l.b16 %v213
    %v246 = vunpack.c.l.b16 %v214
    %v247 = vunpack.c.l.b16 %v215
    %v248 = vunpack.c.l.b16 %v216
    %v249 = vunpack.c.l.b16 %v217
    %v250 = vunpack.c.l.b16 %v218
    %v251 = vunpack.c.l.b16 %v219
    %v252 = vunpack.c.l.b16 %v220
    %v253 = vunpack.c.l.b16 %v221
    %v254 = vunpack.c.l.b16 %v222
    %v255 = vpack.c.b16 %v240, %v239
    %v256 = vpack.c.b16 %v242, %v241
    %v257 = vpack.c.b16 %v244, %v243
    %v258 = vpack.c.b16 %v246, %v245
    %v259 = vpack.c.b16 %v248, %v247
    %v260 = vpack.c.b16 %v250, %v249
    %v261 = vpack.c.b16 %v252, %v251
    %v262 = vpack.c.b16 %v254, %v253
    %271 = vmatprep.subr.bf16.mxu0 0
    %272 = vmatpush1.bf16.msra.mxu0 %v255
    %273 = vmatprep.subr.bf16.mxu0 0
    %274 = vmatpush1.bf16.msra.mxu0 %v256
    %275 = vmatprep.subr.bf16.mxu0 0
    %276 = vmatpush1.bf16.msra.mxu0 %v257
    %277 = vmatprep.subr.bf16.mxu0 0
    %278 = vmatpush1.bf16.msra.mxu0 %v258
    %279 = vmatprep.subr.bf16.mxu0 0
    %280 = vmatpush1.bf16.msra.mxu0 %v259
    %281 = vmatprep.subr.bf16.mxu0 0
    %282 = vmatpush1.bf16.msra.mxu0 %v260
    %283 = vmatprep.subr.bf16.mxu0 0
    %284 = vmatpush1.bf16.msra.mxu0 %v261
    %285 = vmatprep.subr.bf16.mxu0 0
    %286 = vmatpush1.bf16.msra.mxu0 %v262
    %287 = vmatprep.subr.bf16.mxu0 0
    %288 = vmatpush1.bf16.msra.mxu0 0
    %289 = vmatprep.subr.bf16.mxu0 0
    %290 = vmatpush1.bf16.msra.mxu0 0
    %291 = vmatprep.subr.bf16.mxu0 0
    %292 = vmatpush1.bf16.msra.mxu0 0
    %293 = vmatprep.subr.bf16.mxu0 0
    %294 = vmatpush1.bf16.msra.mxu0 0
    %295 = vmatprep.subr.bf16.mxu0 0
    %296 = vmatpush1.bf16.msra.mxu0 0
    %297 = vmatprep.subr.bf16.mxu0 0
    %298 = vmatpush1.bf16.msra.mxu0 0
    %299 = vmatprep.subr.bf16.mxu0 0
    %300 = vmatpush1.bf16.msra.mxu0 0
    %301 = vmatprep.subr.bf16.mxu0 0
    %302 = vmatpush1.bf16.msra.mxu0 0
    %303 = vmatprep.mubr.bf16.mxu0 0
    %304 = vmatmul.mubr.bf16.gmra.mrb[0].mxu0 %v206
    %v305 = vpop.f32.mrb[0].mxu0
    %v306 = vadd.f32 0.0, %v305
    %v307 = vpop.f32.mrb[0].mxu0
    %v308 = vpop.f32.mrb[0].mxu0
    %v309 = vpop.f32.mrb[0].mxu0
    %310 = vdwg.mxu0
    %v311 = vmax.f32 %v306, 0.0
    %v312 = vpack.c.bf16 %v311, %v311
    %v313 = vld [vmem:[#allocation5 + $0xc0] sm:$0xf]
    %v314 = vld [vmem:[#allocation5 + $0xc4] sm:$0xf]
    %v315 = vld [vmem:[#allocation5 + $0xc8] sm:$0xf]
    %v316 = vld [vmem:[#allocation5 + $0xcc] sm:$0xf]
    %v317 = vld [vmem:[#allocation5 + $0xd0] sm:$0xf]
    %v318 = vld [vmem:[#allocation5 + $0xd4] sm:$0xf]
    %v319 = vld [vmem:[#allocation5 + $0xd8] sm:$0xf]
    %v320 = vld [vmem:[#allocation5 + $0xdc] sm:$0xf]
    %v321 = vld [vmem:[#allocation5 + $0xe0] sm:$0xf]
    %v322 = vld [vmem:[#allocation5 + $0xe4] sm:$0xf]
    %v323 = vld [vmem:[#allocation5 + $0xe8] sm:$0xf]
    %v324 = vld [vmem:[#allocation5 + $0xec] sm:$0xf]
    %v325 = vld [vmem:[#allocation5 + $0xf0] sm:$0xf]
    %v326 = vld [vmem:[#allocation5 + $0xf4] sm:$0xf]
    %v327 = vld [vmem:[#allocation5 + $0xf8] sm:$0xf]
    %v328 = vld [vmem:[#allocation5 + $0xfc] sm:$0xf]
    %v345 = vunpack.c.l.b16 %v313
    %v346 = vunpack.c.l.b16 %v314
    %v347 = vunpack.c.l.b16 %v315
    %v348 = vunpack.c.l.b16 %v316
    %v349 = vunpack.c.l.b16 %v317
    %v350 = vunpack.c.l.b16 %v318
    %v351 = vunpack.c.l.b16 %v319
    %v352 = vunpack.c.l.b16 %v320
    %v353 = vunpack.c.l.b16 %v321
    %v354 = vunpack.c.l.b16 %v322
    %v355 = vunpack.c.l.b16 %v323
    %v356 = vunpack.c.l.b16 %v324
    %v357 = vunpack.c.l.b16 %v325
    %v358 = vunpack.c.l.b16 %v326
    %v359 = vunpack.c.l.b16 %v327
    %v360 = vunpack.c.l.b16 %v328
    %v361 = vpack.c.b16 %v346, %v345
    %v362 = vpack.c.b16 %v348, %v347
    %v363 = vpack.c.b16 %v350, %v349
    %v364 = vpack.c.b16 %v352, %v351
    %v365 = vpack.c.b16 %v354, %v353
    %v366 = vpack.c.b16 %v356, %v355
    %v367 = vpack.c.b16 %v358, %v357
    %v368 = vpack.c.b16 %v360, %v359
    %377 = vmatprep.subr.bf16.mxu0 0
    %378 = vmatpush1.bf16.msra.mxu0 %v361
    %379 = vmatprep.subr.bf16.mxu0 0
    %380 = vmatpush1.bf16.msra.mxu0 %v362
    %381 = vmatprep.subr.bf16.mxu0 0
    %382 = vmatpush1.bf16.msra.mxu0 %v363
    %383 = vmatprep.subr.bf16.mxu0 0
    %384 = vmatpush1.bf16.msra.mxu0 %v364
    %385 = vmatprep.subr.bf16.mxu0 0
    %386 = vmatpush1.bf16.msra.mxu0 %v365
    %387 = vmatprep.subr.bf16.mxu0 0
    %388 = vmatpush1.bf16.msra.mxu0 %v366
    %389 = vmatprep.subr.bf16.mxu0 0
    %390 = vmatpush1.bf16.msra.mxu0 %v367
    %391 = vmatprep.subr.bf16.mxu0 0
    %392 = vmatpush1.bf16.msra.mxu0 %v368
    %393 = vmatprep.subr.bf16.mxu0 0
    %394 = vmatpush1.bf16.msra.mxu0 0
    %395 = vmatprep.subr.bf16.mxu0 0
    %396 = vmatpush1.bf16.msra.mxu0 0
    %397 = vmatprep.subr.bf16.mxu0 0
    %398 = vmatpush1.bf16.msra.mxu0 0
    %399 = vmatprep.subr.bf16.mxu0 0
    %400 = vmatpush1.bf16.msra.mxu0 0
    %401 = vmatprep.subr.bf16.mxu0 0
    %402 = vmatpush1.bf16.msra.mxu0 0
    %403 = vmatprep.subr.bf16.mxu0 0
    %404 = vmatpush1.bf16.msra.mxu0 0
    %405 = vmatprep.subr.bf16.mxu0 0
    %406 = vmatpush1.bf16.msra.mxu0 0
    %407 = vmatprep.subr.bf16.mxu0 0
    %408 = vmatpush1.bf16.msra.mxu0 0
    %409 = vmatprep.mubr.bf16.mxu0 0
    %410 = vmatmul.mubr.bf16.gmra.mrb[0].mxu0 %v312
    %v411 = vpop.f32.mrb[0].mxu0
    %v412 = vadd.f32 0.0, %v411
    %v413 = vpop.f32.mrb[0].mxu0
    %v414 = vpop.f32.mrb[0].mxu0
    %v415 = vpop.f32.mrb[0].mxu0
    %416 = vdwg.mxu0
    %v417 = vlaneseq
    %v418 = vand.u32 %v417, 127
    %vm419 = vcmp.lt.s32.totalorder %v418, 4
    %v420 = vtanh.pop %v412
    %v421 = vsel %vm419, %v420, %v412
    %vm422 = vcmask 64512
    %423 = vst.msk [vmem:[#allocation7] sm:$0xff] %vm422, %v421
    // Predicated region
    $region18: #{tpu_custom_call.1} parent=1 // pred_check
      _
    $region19: #{tpu_custom_call.1} parent=1 // pred_check_branch
      %425 = sbr.rel (0) target = $region21
    $region20: #{tpu_custom_call.1} parent=1 // pred_region
      %s427 = ssub.s32 128, 128
      %428 = vsyncadd [#allocation4], %s427
      %s430 = sshll.u32 [#allocation7], 4
      %s431 = int_to_ptr.vmem [resolvable:$true] %s430
      %433 = dma.vmem_to_hbm [thread:$0]  %s431, 128, %s2, [#allocation4]
    $region21: #{tpu_custom_call.1} parent=1 // pred_fallthru
      _
    // Predicated region
    $region22: #{tpu_custom_call.1} parent=1 // pred_check
      _
    $region23: #{tpu_custom_call.1} parent=1 // pred_check_branch
      %435 = sbr.rel (0) target = $region25
    $region24: #{tpu_custom_call.1} parent=1 // pred_region
      %436 = dma.done [#allocation4], 128
    $region25: #{tpu_custom_call.1} parent=1 // pred_fallthru
      _
    %437 = vsyncpa [#allocation3], 1
    %438 = vsyncpa [#allocation6], 1
    %439 = vsyncpa [#allocation4], 1

</llo_original>
